<compile_context>
chip_gen: v5e
topology: v5e:2x2
jax: 0.10.0
libtpu: 0.0.40
codegen_flags: <defaults>
</compile_context>

<pallas_src>
import functools
import math

import jax
import jax.numpy as jnp
from jax.experimental import pallas as pl
from jax.experimental.pallas import tpu as pltpu

_I32_SIGN = -2147483648      # 0x80000000
_NEG_INF_BITS = -8388608     # 0xFF800000 == bit pattern of float32 -inf


def _float_order_key(s):
    """Monotone int32 re-encoding of f32 `s`: a <= b  <=>  key(a) <= key(b)."""
    sign = jnp.int32(_I32_SIGN)
    b = pltpu.bitcast(s, jnp.int32)
    return jnp.where(b >= 0, b, jnp.bitwise_xor(jnp.bitwise_not(b), sign))


def _key_to_float(key):
    """Inverse of _float_order_key."""
    sign = jnp.int32(_I32_SIGN)
    b = jnp.where(key >= 0, key, jnp.bitwise_not(jnp.bitwise_xor(key, sign)))
    return pltpu.bitcast(b, jnp.float32)


def _mask_below_kth(s, topk, reduce_axes):
    """Return `s` with entries strictly below the per-row k-th largest set to -inf.

    A "row" spans all `reduce_axes`.  The threshold is found by an exact
    32-step bitwise bisection on a monotone int32 re-encoding of the scores
    (cost independent of topk, no serially dependent max-peeling).  Only the
    int32 keys stay live across the 32 steps; the masked scores are
    reconstructed from the keys afterwards (halves the live working set).

    Ties at the threshold keep every score >= the k-th largest (same
    threshold-relaxation as the reference).  NaN scores sort above everything
    and are always kept.
    # TODO(synk): bisecting only the high 16 bits would halve the step count
    # at the cost of a bf16-granular (slightly relaxed) tie threshold.
    """
    sign = jnp.int32(_I32_SIGN)
    key = _float_order_key(s)

    row_shape = list(key.shape)
    for ax in reduce_axes:
        row_shape[ax] = 1
    res = jnp.zeros(tuple(row_shape), jnp.int32)   # threshold bits, "unsigned" domain
    for bitpos in range(31, -1, -1):
        bit = jnp.int32(_I32_SIGN if bitpos == 31 else (1 << bitpos))
        cand = jnp.bitwise_or(res, bit)
        cand_s = jnp.bitwise_xor(cand, sign)       # back to signed-compare domain
        cnt = (key >= cand_s).astype(jnp.int32)
        for ax in reduce_axes:
            cnt = jnp.sum(cnt, axis=ax, keepdims=True)
        res = jnp.where(cnt >= topk, cand, res)
    thresh = jnp.bitwise_xor(res, sign)            # key of the exact k-th largest

    kept = _key_to_float(key)                      # == original s, bit-exact
    return jnp.where(key >= thresh, kept, -jnp.inf)


def _pma_topk_block_kernel(seed_ref, x_ref, o_ref, *, scale, topk, flatten_out):
    """Single-tile path: one (B_blk, n_seq, hidden) block of x per grid step."""
    kv = x_ref[...]                                       # (B_blk, n_seq, hidden)
    b_blk, n_seq, _ = kv.shape
    # 1/sqrt(n_heads) folded into Q: kseeds*hidden muls instead of kseeds*n_seq.
    q = (seed_ref[...].astype(jnp.float32) * scale).astype(kv.dtype)   # (kseeds, hidden)
    kseeds = q.shape[0]
    qb = jnp.broadcast_to(q[None, :, :], (b_blk,) + q.shape)

    # Scores: native-dtype MXU inputs, f32 accumulation.
    s = jnp.einsum("bkh,bnh->bkn", qb, kv,
                   preferred_element_type=jnp.float32)    # (B_blk, kseeds, n_seq)
    if topk < n_seq:
        s = _mask_below_kth(s, topk, reduce_axes=(2,))

    # Numerically stable softmax; normalize AFTER attn @ V on the small output.
    m = jnp.max(s, axis=-1, keepdims=True)
    p = jnp.exp(s - m)
    denom = jnp.sum(p, axis=-1, keepdims=True)            # (B_blk, kseeds, 1)
    # TODO(synk): nn.Dropout(0.1) in the activation omitted (eval-mode identity).
    out = jnp.einsum("bkn,bnh->bkh", p.astype(kv.dtype), kv,
                     preferred_element_type=jnp.float32)
    out = (out * pl.reciprocal(denom, approx=True)).astype(o_ref.dtype)

    if flatten_out:
        # Lane-dense store: (B_blk, kseeds*hidden) with kseeds*hidden % 128 == 0.
        o_ref[...] = jnp.concatenate([out[:, k, :] for k in range(kseeds)], axis=-1)
    else:
        o_ref[...] = out


def _pma_topk_chunked_kernel(seed_ref, x_ref, o_ref, s_scratch, acc_ref, *,
                             scale, topk, n_seq, seq_chunk):
    """Two-pass path for large sequences.  grid = (batch, 2 phases, n_chunks).

    Phase 0 streams x chunks and writes scores into the f32 VMEM scratch;
    phase 1 (at chunk 0) runs the top-k threshold + softmax on the scratch,
    then streams x again accumulating P @ V.
    """
    ph = pl.program_id(1)
    c = pl.program_id(2)
    n_chunks = pl.num_programs(2)
    kv = x_ref[...]                                       # (seq_chunk, hidden)
    has_tail = (n_seq % seq_chunk) != 0

    @pl.when(ph == 0)
    def _score_pass():
        q = (seed_ref[...].astype(jnp.float32) * scale).astype(kv.dtype)
        s = jax.lax.dot_general(q, kv, (((1,), (1,)), ((), ())),
                                preferred_element_type=jnp.float32)  # (kseeds, seq_chunk)
        if has_tail:
            col = c * seq_chunk + jax.lax.broadcasted_iota(jnp.int32, s.shape, 1)
            s = jnp.where(col < n_seq, s, -jnp.inf)       # mask padded tail columns
        s_scratch[c] = s

    @pl.when(ph == 1)
    def _attend_pass():
        @pl.when(c == 0)
        def _threshold_softmax():
            s_all = s_scratch[...]                        # (n_chunks, kseeds, seq_chunk)
            if topk < n_seq:
                s_all = _mask_below_kth(s_all, topk, reduce_axes=(2, 0))
            m = jnp.max(jnp.max(s_all, axis=2, keepdims=True), axis=0, keepdims=True)
            p = jnp.exp(s_all - m)
            d = jnp.sum(jnp.sum(p, axis=2, keepdims=True), axis=0, keepdims=True)
            s_scratch[...] = p * pl.reciprocal(d, approx=True)
            acc_ref[...] = jnp.zeros_like(acc_ref)

        v = kv
        if has_tail:
            # Zero padded tail rows so 0-weight columns never multiply inf/NaN garbage.
            row = c * seq_chunk + jax.lax.broadcasted_iota(jnp.int32, kv.shape, 0)
            v = jnp.where(row < n_seq, kv, jnp.zeros_like(kv))
        p_chunk = s_scratch[c]                            # (kseeds, seq_chunk)
        acc_ref[...] += jnp.dot(p_chunk.astype(v.dtype), v,
                                preferred_element_type=jnp.float32)

        @pl.when(c == n_chunks - 1)
        def _store():
            o_ref[...] = acc_ref[...].astype(o_ref.dtype)


def _largest_divisor_leq(n, cap):
    cap = max(1, min(n, cap))
    for d in range(cap, 0, -1):
        if n % d == 0:
            return d
    return 1


def pma_topk_pooling(seed_param, x, *, n_heads, topk, q_chunk_size=2048,
                     seq_chunk=None):
    """seed_param: (1, kseeds, hidden); x: (batch, n_seq, hidden) used as both K and V.

    seq_chunk: optional sequence-tile override; if set and n_seq > seq_chunk
    (or if the full (n_seq, hidden) tile does not fit the VMEM budget), the
    chunked two-pass kernel is used.
    """
    del q_chunk_size  # kseeds << 2048: a single Q chunk per batch element.
    batch, n_seq, hidden = x.shape
    kseeds = seed_param.shape[1]
    topk_eff = min(topk, n_seq)        # args['topk'] = min(self.topk, n_sequences)
    scale = float(n_heads) ** -0.5     # d = n_heads in the activation lambda
    itemsize = x.dtype.itemsize

    # Physical VMEM (64 MiB/TC on v7x, 128 MiB on v5e/v6e); keep 15% headroom.
    try:
        vmem_phys = int(pltpu.get_tpu_info().vmem_capacity_bytes)
    except Exception:
        vmem_phys = 64 << 20
    if vmem_phys <= 0:
        vmem_phys = 64 << 20
    vmem_limit = int(vmem_phys * 0.85)
    budget = int(vmem_limit * 0.75)    # double-buffers + working set must fit here

    score_row = kseeds * n_seq * 4     # one batch element's f32 scores / keys

    def est_single_tile(b_blk):
        return (2 * b_blk * n_seq * hidden * itemsize      # x double-buffer
                + 3 * b_blk * score_row                     # scores/keys/probs working set
                + 2 * b_blk * kseeds * hidden * itemsize    # out double-buffer
                + kseeds * hidden * itemsize + (2 << 20))   # seed + margin

    use_chunked = (seq_chunk is not None and n_seq > seq_chunk) \
        or est_single_tile(1) > budget

    if not use_chunked:
        # ---- Path A: full-sequence tile, several batch elements per step. ----
        per_b_x = n_seq * hidden * itemsize
        cap_target = max(1, (8 << 20) // per_b_x)           # ~4-16 MiB double-buffered x
        lin = est_single_tile(2) - est_single_tile(1)
        cap_vmem = max(1, (budget - (est_single_tile(1) - lin)) // max(lin, 1))
        b_blk = _largest_divisor_leq(batch, min(cap_target, cap_vmem))

        flatten_out = (hidden % 128 != 0 and (kseeds * hidden) % 128 == 0
                       and (b_blk % 8 == 0 or b_blk == batch))

        if flatten_out:
            out_shape = jax.ShapeDtypeStruct((batch, kseeds * hidden), x.dtype)
            out_spec = pl.BlockSpec((b_blk, kseeds * hidden), lambda i: (i, 0))
        else:
            out_shape = jax.ShapeDtypeStruct((batch, kseeds, hidden), x.dtype)
            out_spec = pl.BlockSpec((b_blk, kseeds, hidden), lambda i: (i, 0, 0))

        kernel = functools.partial(_pma_topk_block_kernel, scale=scale,
                                   topk=topk_eff, flatten_out=flatten_out)
        out = pl.pallas_call(
            kernel,
            out_shape=out_shape,
            grid_spec=pltpu.PrefetchScalarGridSpec(
                num_scalar_prefetch=0,
                grid=(batch // b_blk,),
                in_specs=[
                    # Seed/Q: constant block index -> DMA'd once, reused every step.
                    pl.BlockSpec((None, kseeds, hidden), lambda i: (0, 0, 0)),
                    # x serves as both K and V: one (B_blk, n_seq, hidden) tile.
                    pl.BlockSpec((b_blk, n_seq, hidden), lambda i: (i, 0, 0)),
                ],
                out_specs=out_spec,
            ),
            compiler_params=pltpu.CompilerParams(
                dimension_semantics=("parallel",),
                vmem_limit_bytes=vmem_limit),
        )(seed_param, x)
        if flatten_out:
            out = out.reshape(batch, kseeds, hidden)
        return out

    # ---- Path B: n_seq-chunked two-pass kernel (large sequences). ----
    if seq_chunk is None:
        seq_chunk = max(128, ((4 << 20) // max(hidden * itemsize, 1)) // 128 * 128)
    seq_chunk = max(128, -(-int(seq_chunk) // 128) * 128)   # round up to 128 lanes
    n_chunks = pl.cdiv(n_seq, seq_chunk)

    kernel = functools.partial(_pma_topk_chunked_kernel, scale=scale,
                               topk=topk_eff, n_seq=n_seq, seq_chunk=seq_chunk)
    # TODO(synk): for batch==1 on multi-TensorCore chips (v7x), split kseeds (or the
    # chunk axis) onto a second parallel grid axis so both cores are used.
    return pl.pallas_call(
        kernel,
        out_shape=jax.ShapeDtypeStruct((batch, kseeds, hidden), x.dtype),
        grid_spec=pltpu.PrefetchScalarGridSpec(
            num_scalar_prefetch=0,
            grid=(batch, 2, n_chunks),
            in_specs=[
                pl.BlockSpec((None, kseeds, hidden), lambda b, ph, c: (0, 0, 0)),
                pl.BlockSpec((None, seq_chunk, hidden), lambda b, ph, c: (b, c, 0)),
            ],
            out_specs=pl.BlockSpec((None, kseeds, hidden), lambda b, ph, c: (b, 0, 0)),
            scratch_shapes=[
                pltpu.VMEM((n_chunks, kseeds, seq_chunk), jnp.float32),  # scores -> probs
                pltpu.VMEM((kseeds, hidden), jnp.float32),               # P @ V accumulator
            ],
        ),
        compiler_params=pltpu.CompilerParams(
            dimension_semantics=("parallel", "arbitrary", "arbitrary"),
            vmem_limit_bytes=vmem_limit),
    )(seed_param, x)


def _reference(seed_param, x, *, n_heads, topk):
    """Pure-JAX reference of the PyTorch forward (eval mode)."""
    batch, n_seq, hidden = x.shape
    q = jnp.broadcast_to(seed_param, (batch,) + seed_param.shape[1:]).astype(jnp.float32)
    xf = x.astype(jnp.float32)
    s = jnp.einsum("bkh,bnh->bkn", q, xf) * (float(n_heads) ** -0.5)
    k = min(topk, n_seq)
    if k < n_seq:
        kth = jnp.sort(s, axis=-1)[..., n_seq - k]
        s = jnp.where(s >= kth[..., None], s, -jnp.inf)
    p = jax.nn.softmax(s, axis=-1)
    return jnp.einsum("bkn,bnh->bkh", p, xf).astype(x.dtype)


if __name__ == "__main__":
    # Small shapes consistent with the module config:
    # k_seeds=4, hidden_size=32, n_heads=4.
    kseeds, hidden, n_heads = 4, 32, 4

    key = jax.random.PRNGKey(0)
    k_seed, k_x1, k_x2 = jax.random.split(key, 3)

    # Xavier-uniform init of seed (1, kseeds, hidden), as nn.init.xavier_uniform_:
    fan_in, fan_out = kseeds * hidden, 1 * hidden
    bound = math.sqrt(6.0 / (fan_in + fan_out))
    seed_param = jax.random.uniform(
        k_seed, (1, kseeds, hidden), jnp.float32, minval=-bound, maxval=bound)

    # --- Path A (single-tile, batch-blocked): batch=2, n_seq=8. ---
    x_a = jax.random.normal(k_x1, (2, 8, hidden), dtype=jnp.float32)
    out_full = pma_topk_pooling(seed_param, x_a, n_heads=n_heads, topk=128)  # no masking
    out_topk = pma_topk_pooling(seed_param, x_a, n_heads=n_heads, topk=6)    # top-k path

    # --- Path B (n_seq-chunked two-pass): batch=2, n_seq=200, forced 128-row chunks. ---
    x_b = jax.random.normal(k_x2, (2, 200, hidden), dtype=jnp.float32)
    out_c_full = pma_topk_pooling(seed_param, x_b, n_heads=n_heads, topk=512, seq_chunk=128)
    out_c_topk = pma_topk_pooling(seed_param, x_b, n_heads=n_heads, topk=50, seq_chunk=128)

    jax.block_until_ready((out_full, out_topk, out_c_full, out_c_topk))

    assert out_full.shape == (2, kseeds, hidden)
    assert out_topk.shape == (2, kseeds, hidden)
    assert out_c_full.shape == (2, kseeds, hidden)
    assert out_c_topk.shape == (2, kseeds, hidden)

    ref = functools.partial(_reference, n_heads=n_heads)
    assert jnp.allclose(out_full, ref(seed_param, x_a, topk=128), rtol=2e-2, atol=2e-2)
    assert jnp.allclose(out_topk, ref(seed_param, x_a, topk=6), rtol=2e-2, atol=2e-2)
    assert jnp.allclose(out_c_full, ref(seed_param, x_b, topk=512), rtol=2e-2, atol=2e-2)
    assert jnp.allclose(out_c_topk, ref(seed_param, x_b, topk=50), rtol=2e-2, atol=2e-2)

    print("KERNEL_OK")
</pallas_src>

<mosaic_0001>
module attributes {stable_mosaic.version = 11 : i64} {
  func.func @_pma_topk_block_kernel(%arg0: i32, %arg1: memref<1x4x32xf32, #tpu.memory_space<vmem>>, %arg2: memref<2x8x32xf32, #tpu.memory_space<vmem>>, %arg3: memref<2x128xf32, #tpu.memory_space<vmem>>) attributes {dimension_semantics = [#tpu.dimension_semantics<parallel>], iteration_bounds = array<i64: 1>, scalar_prefetch = 0 : i64, scratch_operands = 0 : i64, tpu.core_type = #tpu.core_type<tc>, window_params = [{pipeline_mode = #tpu.pipeline_mode<synchronous>, transform_indices = @transform_0, window_bounds = array<i64: 1, 4, 32>}, {transform_indices = @transform_1, window_bounds = array<i64: 2, 8, 32>}, {transform_indices = @transform_2, window_bounds = array<i64: 2, 128>}]} {
    %c0 = arith.constant 0 : index
    %c0_0 = arith.constant 0 : index
    %c0_1 = arith.constant 0 : index
    %0 = vector.load %arg2[%c0, %c0_0, %c0_1] : memref<2x8x32xf32, #tpu.memory_space<vmem>>, vector<2x8x32xf32>
    %c0_2 = arith.constant 0 : index
    %c0_3 = arith.constant 0 : index
    %c0_4 = arith.constant 0 : index
    %1 = vector.load %arg1[%c0_2, %c0_3, %c0_4] : memref<1x4x32xf32, #tpu.memory_space<vmem>>, vector<1x4x32xf32>
    %2 = vector.shape_cast %1 : vector<1x4x32xf32> to vector<4x32xf32>
    %cst = arith.constant 5.000000e-01 : f32
    %3 = vector.broadcast %cst : f32 to vector<4x32xf32>
    %4 = arith.mulf %2, %3 : vector<4x32xf32>
    %5 = vector.shape_cast %4 : vector<4x32xf32> to vector<1x4x32xf32>
    %6 = vector.shape_cast %5 : vector<1x4x32xf32> to vector<1x4x32xf32>
    %7 = vector.broadcast %6 : vector<1x4x32xf32> to vector<2x4x32xf32>
    "tpu.trace_start"() <{level = 10 : i32, message = "bkh,bnh->bkn"}> : () -> ()
    %cst_5 = arith.constant dense<0.000000e+00> : vector<2x4x8xf32>
    %8 = tpu.matmul %7, %0, %cst_5 {dimension_numbers = #tpu.dot_dimension_numbers<[2], [2], [1], [1], [0, 0, 0, 1, 1, 1], [0], [0]>} : vector<2x4x32xf32>, vector<2x8x32xf32>, vector<2x4x8xf32> -> vector<2x4x8xf32>
    "tpu.trace_stop"() : () -> ()
    %cst_6 = arith.constant dense<0xFF800000> : vector<2x4xf32>
    %9 = vector.multi_reduction <maximumf>, %8, %cst_6 [2] : vector<2x4x8xf32> to vector<2x4xf32>
    %10 = vector.shape_cast %9 : vector<2x4xf32> to vector<2x4x1xf32>
    %11 = vector.broadcast %10 : vector<2x4x1xf32> to vector<2x4x8xf32>
    %12 = arith.subf %8, %11 : vector<2x4x8xf32>
    %13 = math.exp %12 : vector<2x4x8xf32>
    %cst_7 = arith.constant dense<0.000000e+00> : vector<2x4xf32>
    %14 = vector.multi_reduction <add>, %13, %cst_7 [2] : vector<2x4x8xf32> to vector<2x4xf32>
    %15 = vector.shape_cast %14 : vector<2x4xf32> to vector<2x4x1xf32>
    "tpu.trace_start"() <{level = 10 : i32, message = "bkn,bnh->bkh"}> : () -> ()
    %cst_8 = arith.constant dense<0.000000e+00> : vector<2x4x32xf32>
    %16 = tpu.matmul %13, %0, %cst_8 {dimension_numbers = #tpu.dot_dimension_numbers<[2], [1], [1], [2], [0, 0, 0, 1, 1, 2], [0], [0]>} : vector<2x4x8xf32>, vector<2x8x32xf32>, vector<2x4x32xf32> -> vector<2x4x32xf32>
    "tpu.trace_stop"() : () -> ()
    %17 = tpu.reciprocal %15 {approx = true} : vector<2x4x1xf32> -> vector<2x4x1xf32>
    %18 = vector.broadcast %17 : vector<2x4x1xf32> to vector<2x4x32xf32>
    %19 = arith.mulf %16, %18 : vector<2x4x32xf32>
    %20 = vector.extract_strided_slice %19 {offsets = [0, 0, 0], sizes = [2, 1, 32], strides = [1, 1, 1]} : vector<2x4x32xf32> to vector<2x1x32xf32>
    %21 = vector.shape_cast %20 : vector<2x1x32xf32> to vector<2x32xf32>
    %22 = vector.extract_strided_slice %19 {offsets = [0, 1, 0], sizes = [2, 1, 32], strides = [1, 1, 1]} : vector<2x4x32xf32> to vector<2x1x32xf32>
    %23 = vector.shape_cast %22 : vector<2x1x32xf32> to vector<2x32xf32>
    %24 = vector.extract_strided_slice %19 {offsets = [0, 2, 0], sizes = [2, 1, 32], strides = [1, 1, 1]} : vector<2x4x32xf32> to vector<2x1x32xf32>
    %25 = vector.shape_cast %24 : vector<2x1x32xf32> to vector<2x32xf32>
    %26 = vector.extract_strided_slice %19 {offsets = [0, 3, 0], sizes = [2, 1, 32], strides = [1, 1, 1]} : vector<2x4x32xf32> to vector<2x1x32xf32>
    %27 = vector.shape_cast %26 : vector<2x1x32xf32> to vector<2x32xf32>
    %28 = tpu.concatenate %21, %23, %25, %27 in 1 : vector<2x32xf32>, vector<2x32xf32>, vector<2x32xf32>, vector<2x32xf32> -> vector<2x128xf32>
    %c0_9 = arith.constant 0 : index
    %c0_10 = arith.constant 0 : index
    %29 = vector.load %arg3[%c0_9, %c0_10] : memref<2x128xf32, #tpu.memory_space<vmem>>, vector<2x128xf32>
    tpu.vector_store %arg3[%c0_9, %c0_10], %28 {strides = array<i32>} : memref<2x128xf32, #tpu.memory_space<vmem>>, vector<2x128xf32>,
    return
  }
  func.func @transform_0(%arg0: i32) -> (i32, i32, i32) {
    %c0_i32 = arith.constant 0 : i32
    %c0_i32_0 = arith.constant 0 : i32
    %c0_i32_1 = arith.constant 0 : i32
    %c0_i32_2 = arith.constant 0 : i32
    return %c0_i32, %c0_i32_0, %c0_i32_1 : i32, i32, i32
  }
  func.func @transform_1(%arg0: i32) -> (i32, i32, i32) {
    %c0_i32 = arith.constant 0 : i32
    %c0_i32_0 = arith.constant 0 : i32
    %c0_i32_1 = arith.constant 0 : i32
    return %arg0, %c0_i32, %c0_i32_0 : i32, i32, i32
  }
  func.func @transform_2(%arg0: i32) -> (i32, i32) {
    %c0_i32 = arith.constant 0 : i32
    %c0_i32_0 = arith.constant 0 : i32
    return %arg0, %c0_i32 : i32, i32
  }
}

</mosaic_0001>

<llo_original>
// kernel: tpu_custom_call.1
$region0: #{tpu_custom_call.1}
  #allocation0 [shape = 'u32[]', space=smem, size = 0x4, offset = 0x4, fixed_abs, tag = 'smem constant byte address 0x4 - core index']
  #allocation1 [shape = 'u32[72,128]{1,0:T(1,128)}', space=vmem, size = 0x9000, scoped, tag = 'internal scratch']
  %s0 = inlined_call_operand.hbm [shape: f32[1,4,32], index: 0, kind: input, shape index: {}]
  %s1 = inlined_call_operand.hbm [shape: f32[2,8,32], index: 1, kind: input, shape index: {}]
  %s2 = inlined_call_operand.hbm [shape: f32[2,128], index: 2, kind: output, shape index: {}]
  %s3 = sld [smem:[#allocation0]]
  $region26: #{tpu_custom_call.1} parent=0
    _
  %s5 = ssub.s32 1, %s3
  %s6 = scalar_select 0, %s5, %s3
  $region1: #{tpu_custom_call.1} parent=0
    #allocation2 [shape = 'u8[2048]{0}', space=vmem, size = 0x800, scoped, tag = 'input window, operand 0, single buffered']
    #allocation3 [shape = 's32[1]{0}', space=sflag, size = 0x4, scoped, tag = 'scoped memory for tpu_custom_call.1']
    #allocation4 [shape = 's32[1]{0}', space=sflag, size = 0x4, scoped, tag = 'scoped memory for tpu_custom_call.1']
    #allocation5 [shape = 'u8[8192]{0}', space=vmem, size = 0x2000, scoped, tag = 'input window, operand 1, single buffered']
    #allocation6 [shape = 's32[1]{0}', space=sflag, size = 0x4, scoped, tag = 'scoped memory for tpu_custom_call.1']
    #allocation7 [shape = 'u8[1024]{0}', space=vmem, size = 0x400, scoped, tag = 'output window, operand 0, single buffered']
    %7 = vsyncpa [#allocation3], 0
    %8 = vsyncpa [#allocation6], 0
    %9 = vsyncpa [#allocation4], 0
    // Predicated region
    $region2: #{tpu_custom_call.1} parent=1 // pred_check
      _
    $region3: #{tpu_custom_call.1} parent=1 // pred_check_branch
      %11 = sbr.rel (0) target = $region5
    $region4: #{tpu_custom_call.1} parent=1 // pred_region
      %13 = vsyncadd [#allocation3], 0
      %s15 = sshll.u32 %s0, 4
      %s16 = int_to_ptr.hbm [resolvable:$true] %s15
      %s17 = sshll.u32 [#allocation2], 4
      %s18 = int_to_ptr.vmem [resolvable:$true] %s17
      %20 = dma.hbm_to_vmem [thread:$0]  %s16, 64, %s18, [#allocation3]
    $region5: #{tpu_custom_call.1} parent=1 // pred_fallthru
      _
    // Predicated region
    $region6: #{tpu_custom_call.1} parent=1 // pred_check
      _
    $region7: #{tpu_custom_call.1} parent=1 // pred_check_branch
      %22 = sbr.rel (0) target = $region9
    $region8: #{tpu_custom_call.1} parent=1 // pred_region
      %24 = vsyncadd [#allocation6], 0
      %s25 = sshll.u32 %s1, 4
      %s26 = int_to_ptr.hbm [resolvable:$true] %s25
      %s27 = sshll.u32 [#allocation5], 4
      %s28 = int_to_ptr.vmem [resolvable:$true] %s27
      %33 = dma.hbm_to_vmem [thread:$0]  %s26, 256, %s28, [#allocation6], 128, 128, 8
    $region9: #{tpu_custom_call.1} parent=1 // pred_fallthru
      _
    // Predicated region
    $region10: #{tpu_custom_call.1} parent=1 // pred_check
      _
    $region11: #{tpu_custom_call.1} parent=1 // pred_check_branch
      %35 = sbr.rel (0) target = $region13
    $region12: #{tpu_custom_call.1} parent=1 // pred_region
      %37 = dma.done [#allocation3], 64
    $region13: #{tpu_custom_call.1} parent=1 // pred_fallthru
      _
    // Predicated region
    $region14: #{tpu_custom_call.1} parent=1 // pred_check
      _
    $region15: #{tpu_custom_call.1} parent=1 // pred_check_branch
      %39 = sbr.rel (0) target = $region17
    $region16: #{tpu_custom_call.1} parent=1 // pred_region
      %41 = dma.done [#allocation6], 256
    $region17: #{tpu_custom_call.1} parent=1 // pred_fallthru
      _
    %v42 = vld [vmem:[#allocation5] sm:$0xff]
    %v43 = vld [vmem:[#allocation5 + $0x8] sm:$0xff]
    %v44 = vld [vmem:[#allocation2] sm:$0xf]
    %v45 = vmul.f32 %v44, 0.5
    %vm46 = vcmask 261120
    %v48 = vsel %vm46, %v45, 0
    %v51 = vsel %vm46, %v42, 0
    %53 = vmatpush.xpose.msra.mxu0 0.0
    %54 = vmatpush.xpose.msra.mxu0 0.0
    %55 = vmatpush.xpose.msra.mxu0 0.0
    %56 = vmatpush.xpose.msra.mxu0 0.0
    %57 = vmatpush.xpose.msra.mxu0 0.0
    %58 = vmatpush.xpose.msra.mxu0 0.0
    %59 = vmatpush.xpose.msra.mxu0 0.0
    %60 = vmatpush.xpose.msra.mxu0 0.0
    %61 = vmatpush.xpose.msra.mxu0 0.0
    %62 = vmatpush.xpose.msra.mxu0 0.0
    %63 = vmatpush.xpose.msra.mxu0 0.0
    %64 = vmatpush.xpose.msra.mxu0 0.0
    %65 = vmatpush.xpose.msra.mxu0 0.0
    %66 = vmatpush.xpose.msra.mxu0 0.0
    %67 = vmatpush.xpose.msra.mxu0 0.0
    %68 = vmatpush.xpose.msra.mxu0 %v51
    %69 = vmatmul.f32.gmra.mxu0 %v48
    %v70 = vpop.f32.mrf.mxu0
    %v71 = vadd.f32 0.0, %v70
    %72 = vdwg.mxu0
    %v74 = vsel %vm46, %v43, 0
    %76 = vmatpush.xpose.msra.mxu0 0.0
    %77 = vmatpush.xpose.msra.mxu0 0.0
    %78 = vmatpush.xpose.msra.mxu0 0.0
    %79 = vmatpush.xpose.msra.mxu0 0.0
    %80 = vmatpush.xpose.msra.mxu0 0.0
    %81 = vmatpush.xpose.msra.mxu0 0.0
    %82 = vmatpush.xpose.msra.mxu0 0.0
    %83 = vmatpush.xpose.msra.mxu0 0.0
    %84 = vmatpush.xpose.msra.mxu0 0.0
    %85 = vmatpush.xpose.msra.mxu0 0.0
    %86 = vmatpush.xpose.msra.mxu0 0.0
    %87 = vmatpush.xpose.msra.mxu0 0.0
    %88 = vmatpush.xpose.msra.mxu0 0.0
    %89 = vmatpush.xpose.msra.mxu0 0.0
    %90 = vmatpush.xpose.msra.mxu0 0.0
    %91 = vmatpush.xpose.msra.mxu0 %v74
    %92 = vmatmul.f32.gmra.mxu0 %v48
    %v93 = vpop.f32.mrf.mxu0
    %v94 = vadd.f32 0.0, %v93
    %95 = vdwg.mxu0
    %vm96 = vcmask 60416
    %v97 = vsel %vm96, %v71, -inf
    %98 = vmax.xlane.f32.xlu0 %v97
    %v99 = vpop.xlane.xlu0 %98
    %v100 = vsel %vm96, %v94, -inf
    %101 = vmax.xlane.f32.xlu0 %v100
    %v102 = vpop.xlane.xlu0 %101
    %v103 = vsub.f32 %v71, %v99
    %v104 = vsub.f32 %v94, %v102
    %v105 = vmul.f32 %v103, 1.442695
    %v106 = vpow.pop %v105
    %v107 = vmul.f32 %v104, 1.442695
    %v108 = vpow.pop %v107
    %v109 = vsel %vm96, %v106, 0.0
    %110 = vadd.xlane.f32.xlu0 %v109
    %v111 = vpop.xlane.xlu0 %110
    %v112 = vsel %vm96, %v108, 0.0
    %113 = vadd.xlane.f32.xlu0 %v112
    %v114 = vpop.xlane.xlu0 %113
    %vm115 = vcmask 64512
    %v117 = vsel %vm115, %v106, 0
    %119 = vmatpush.msra.mxu0 0.0
    %120 = vmatpush.msra.mxu0 0.0
    %121 = vmatpush.msra.mxu0 0.0
    %122 = vmatpush.msra.mxu0 0.0
    %123 = vmatpush.msra.mxu0 0.0
    %124 = vmatpush.msra.mxu0 0.0
    %125 = vmatpush.msra.mxu0 0.0
    %126 = vmatpush.msra.mxu0 0.0
    %127 = vmatpush.msra.mxu0 0.0
    %128 = vmatpush.msra.mxu0 0.0
    %129 = vmatpush.msra.mxu0 0.0
    %130 = vmatpush.msra.mxu0 0.0
    %131 = vmatpush.msra.mxu0 0.0
    %132 = vmatpush.msra.mxu0 0.0
    %133 = vmatpush.msra.mxu0 0.0
    %134 = vmatpush.msra.mxu0 %v42
    %135 = vmatmul.f32.gmra.mxu0 %v117
    %v136 = vpop.f32.mrf.mxu0
    %v137 = vadd.f32 0.0, %v136
    %138 = vdwg.mxu0
    %v140 = vsel %vm115, %v108, 0
    %142 = vmatpush.msra.mxu0 0.0
    %143 = vmatpush.msra.mxu0 0.0
    %144 = vmatpush.msra.mxu0 0.0
    %145 = vmatpush.msra.mxu0 0.0
    %146 = vmatpush.msra.mxu0 0.0
    %147 = vmatpush.msra.mxu0 0.0
    %148 = vmatpush.msra.mxu0 0.0
    %149 = vmatpush.msra.mxu0 0.0
    %150 = vmatpush.msra.mxu0 0.0
    %151 = vmatpush.msra.mxu0 0.0
    %152 = vmatpush.msra.mxu0 0.0
    %153 = vmatpush.msra.mxu0 0.0
    %154 = vmatpush.msra.mxu0 0.0
    %155 = vmatpush.msra.mxu0 0.0
    %156 = vmatpush.msra.mxu0 0.0
    %157 = vmatpush.msra.mxu0 %v43
    %158 = vmatmul.f32.gmra.mxu0 %v140
    %v159 = vpop.f32.mrf.mxu0
    %v160 = vadd.f32 0.0, %v159
    %161 = vdwg.mxu0
    %v162 = vrcp.pop %v111
    %v163 = vrcp.pop %v114
    %v164 = vmul.f32 %v137, %v162
    %v165 = vmul.f32 %v160, %v163
    %v168 = vrot.slane %v165, 7
    %vm169 = vcmask 1041409
    %v170 = vsel %vm169, %v168, %v164
    %v172 = vrot.slane %v164, 1
    %v173 = vsel %vm169, %v165, %v172
    %174 = vrot.lane.b32.xlu0 %v173, 32
    %v175 = vpop.permute.xlu0 %174
    %v177 = vrot.slane %v164, 2
    %v178 = vrot.slane %v165, 1
    %v179 = vsel %vm169, %v178, %v177
    %180 = vrot.lane.b32.xlu0 %v179, 64
    %v181 = vpop.permute.xlu0 %180
    %v183 = vrot.slane %v164, 3
    %v184 = vrot.slane %v165, 2
    %v185 = vsel %vm169, %v184, %v183
    %186 = vrot.lane.b32.xlu0 %v185, 96
    %v187 = vpop.permute.xlu0 %186
    %v189 = vsel %vm46, %v170, %v175
    %vm190 = vcmask 523264
    %v191 = vsel %vm190, %v189, %v181
    %vm192 = vcmask 785408
    %v193 = vsel %vm192, %v191, %v187
    %194 = vst [vmem:[#allocation7] sm:$0x3] %v193
    // Predicated region
    $region18: #{tpu_custom_call.1} parent=1 // pred_check
      _
    $region19: #{tpu_custom_call.1} parent=1 // pred_check_branch
      %196 = sbr.rel (0) target = $region21
    $region20: #{tpu_custom_call.1} parent=1 // pred_region
      %198 = vsyncadd [#allocation4], 0
      %s200 = sshll.u32 [#allocation7], 4
      %s201 = int_to_ptr.vmem [resolvable:$true] %s200
      %s202 = sshll.u32 %s2, 4
      %s203 = int_to_ptr.hbm [resolvable:$true] %s202
      %205 = dma.vmem_to_hbm [thread:$0]  %s201, 32, %s203, [#allocation4]
    $region21: #{tpu_custom_call.1} parent=1 // pred_fallthru
      _
    // Predicated region
    $region22: #{tpu_custom_call.1} parent=1 // pred_check
      _
    $region23: #{tpu_custom_call.1} parent=1 // pred_check_branch
      %207 = sbr.rel (0) target = $region25
    $region24: #{tpu_custom_call.1} parent=1 // pred_region
      %209 = dma.done [#allocation4], 32
    $region25: #{tpu_custom_call.1} parent=1 // pred_fallthru
      _
    %210 = vsyncpa [#allocation3], 1
    %211 = vsyncpa [#allocation6], 1
    %212 = vsyncpa [#allocation4], 1

</llo_original>
